<compile_context>
chip_gen: v7x
topology: tpu7x:2x2x1
jax: 0.10.0
libtpu: 0.0.40
codegen_flags: <defaults>
</compile_context>

<pallas_src>
import jax
import jax.numpy as jnp
from jax.experimental import pallas as pl
from jax.experimental.pallas import tpu as pltpu

BN_EPS = 1e-5
LANE = 128


def _fold_bn(w_oihw, gamma, beta, mean, var):
    """Fold inference-mode BatchNorm into conv weights + per-channel bias."""
    inv_std = 1.0 / jnp.sqrt(var + BN_EPS)
    scale = gamma * inv_std                              # (Cout,)
    w_scaled = w_oihw * scale[:, None, None, None]       # scale folded into W
    bias = beta - mean * scale
    return w_scaled.astype(jnp.float32), bias.astype(jnp.float32)


def _pick_tile_h(ho, wo, n_parallel_other, target_rows=256):
    """Largest divisor th of ho with th*wo <= target_rows output rows.

    target_rows ~256 keeps the f32 matmul result within a sane vreg budget
    while still feeding the MXU >=256 LHS rows.  If the rest of the grid
    exposes <2 parallel chunks, prefer >=2 row tiles (v7x has 2 TensorCores).
    """
    best = 1
    for d in range(1, ho + 1):
        if ho % d == 0 and d * wo <= target_rows:
            best = d
    if n_parallel_other < 2 and best == ho and ho % 2 == 0:
        best = ho // 2
    return best


def _space_to_depth_stride2(xp, w_hwio):
    """Rewrite a stride-2 conv on padded input `xp` (N,Hp,Wp,C) as a stride-1
    conv on a 2x2 phase-packed input with regrouped weights.

    Removes strided slicing inside the kernel and quadruples the contraction
    depth per tap.
    """
    n, hp, wp, cin = xp.shape
    kh, kw, _, cout = w_hwio.shape
    # pad spatial dims to even so the 2x2 phase reshape is exact
    xp = jnp.pad(xp, ((0, 0), (0, hp % 2), (0, wp % 2), (0, 0)))
    hp2, wp2 = xp.shape[1] // 2, xp.shape[2] // 2
    xs = xp.reshape(n, hp2, 2, wp2, 2, cin)
    xs = jnp.transpose(xs, (0, 1, 3, 2, 4, 5)).reshape(n, hp2, wp2, 4 * cin)

    kh2, kw2 = (kh + 1) // 2, (kw + 1) // 2
    w2 = jnp.zeros((kh2, kw2, 2, 2, cin, cout), w_hwio.dtype)
    for i in range(kh):                         # tap (i,j) -> s2d tap + phase
        for j in range(kw):
            w2 = w2.at[i // 2, j // 2, i % 2, j % 2].set(w_hwio[i, j])
    w2 = w2.reshape(kh2, kw2, 4 * cin, cout)    # channel order matches xs
    return xs, w2


def _make_conv_bn_kernel(kh, kw, th, wo, cin, apply_relu, has_residual):
    """Fused stride-1 conv (single K*Cin-deep MXU matmul via in-kernel im2col)
    + folded-BN bias (+residual) (+ReLU) epilogue in f32."""
    K = kh * kw

    def kernel(*refs):
        if has_residual:
            x_ref, w_ref, b_ref, res_ref, out_ref, patch_ref = refs
        else:
            x_ref, w_ref, b_ref, out_ref, patch_ref = refs

        h0 = pl.multiple_of(pl.program_id(2) * th, th)   # output-row tile base

        # In-kernel im2col: pack the kh*kw taps along the contraction axis of
        # a VMEM scratch.  Unit-stride slices only (stride-2 was removed by
        # space-to-depth in the wrapper).
        k = 0
        for i in range(kh):                 # static, unrolled
            for j in range(kw):
                tap = x_ref[0, pl.ds(h0 + i, th), pl.ds(j, wo), :]
                patch_ref[:, k * cin:(k + 1) * cin] = tap.reshape(th * wo, cin)
                k += 1

        # One (th*wo, K*cin) x (K*cin, tc) MXU matmul, f32 accumulation.
        y = jnp.dot(patch_ref[...], w_ref[...],
                    preferred_element_type=jnp.float32)
        y = y + b_ref[...]                               # folded-BN bias
        if has_residual:
            y = y + res_ref[0].astype(jnp.float32)
        if apply_relu:
            y = jnp.maximum(y, 0.0)
        out_ref[0] = y.astype(out_ref.dtype)             # dense, lane-wide store

    return kernel


def conv_bn(x, w_oihw, gamma, beta, mean, var, *, stride=1, relu=False,
            residual=None):
    """Conv2d(bias=False) + BatchNorm2d (+residual) (+ReLU).

    x:        (N, H, W, Cx) bf16 NHWC; Cx >= Cin (extra channels are zeros).
    w_oihw:   (Cout, Cin, kh, kw) f32, PyTorch layout.
    residual: (N, Ho, Wo, Cr) bf16 or None (Cr padded with zeros to Cout_pad).
    returns:  (N, Ho, Wo, Cout_pad) bf16, Cout_pad = round_up(Cout, 128);
              channels >= Cout are zero.
    """
    assert stride in (1, 2)
    n, h, w_in, cx = x.shape
    cout, cin, kh, kw = w_oihw.shape
    assert cx >= cin
    pad = (kh - 1) // 2                  # 3x3 -> 1, 1x1 -> 0 (as in the module)

    ho = (h + 2 * pad - kh) // stride + 1
    wo = (w_in + 2 * pad - kw) // stride + 1

    w_scaled, bias = _fold_bn(w_oihw, gamma, beta, mean, var)
    # OIHW -> HWIO; zero-pad the input-channel axis to Cx so the kernel can
    # consume the channel-padded previous-stage activation directly.
    w_hwio = jnp.transpose(w_scaled, (2, 3, 1, 0))
    if cx > cin:
        w_hwio = jnp.pad(w_hwio, ((0, 0), (0, 0), (0, cx - cin), (0, 0)))

    # Spatial halo padding once; the whole padded image is one resident block.
    xp = jnp.pad(x, ((0, 0), (pad, pad), (pad, pad), (0, 0))).astype(jnp.bfloat16)

    if stride == 2:
        xp, w_hwio = _space_to_depth_stride2(xp, w_hwio)

    hp, wp, cin_eff = xp.shape[1], xp.shape[2], xp.shape[3]
    kh_e, kw_e = w_hwio.shape[0], w_hwio.shape[1]
    K = kh_e * kw_e

    # Lane-dense output tiles; 256-wide tiles when they divide Cout_pad
    # (feeds the 2x256^2 MXU on v6e/v7x), 128 otherwise (v5e-friendly).
    cpad = ((cout + LANE - 1) // LANE) * LANE
    tc = 256 if cpad % 256 == 0 else LANE
    n_c = cpad // tc

    # Weights as one (K*Cin_eff, Cout_pad) bf16 matrix for the single deep dot.
    w_mat = w_hwio.reshape(K * cin_eff, cout)
    w_mat = jnp.pad(w_mat, ((0, 0), (0, cpad - cout))).astype(jnp.bfloat16)
    bias_p = jnp.pad(bias, (0, cpad - cout)).reshape(1, cpad)

    th = _pick_tile_h(ho, wo, n * n_c)
    assert ho % th == 0
    grid = (n, n_c, ho // th)        # weights/bias held across the row axis

    kernel = _make_conv_bn_kernel(kh_e, kw_e, th, wo, cin_eff, relu,
                                  residual is not None)

    in_specs = [
        pl.BlockSpec((1, hp, wp, cin_eff), lambda b, c, r: (b, 0, 0, 0)),
        pl.BlockSpec((K * cin_eff, tc), lambda b, c, r: (0, c)),
        pl.BlockSpec((1, tc), lambda b, c, r: (0, c)),
    ]
    args = [xp, w_mat, bias_p]
    if residual is not None:
        res = residual.astype(jnp.bfloat16)
        rc = res.shape[-1]
        assert rc <= cpad
        if rc < cpad:
            res = jnp.pad(res, ((0, 0), (0, 0), (0, 0), (0, cpad - rc)))
        res = res.reshape(n, ho * wo, cpad)               # flat row axis
        in_specs.append(pl.BlockSpec((1, th * wo, tc), lambda b, c, r: (b, r, c)))
        args.append(res)

    out = pl.pallas_call(
        kernel,
        out_shape=jax.ShapeDtypeStruct((n, ho * wo, cpad), jnp.bfloat16),
        grid=grid,
        in_specs=in_specs,
        out_specs=pl.BlockSpec((1, th * wo, tc), lambda b, c, r: (b, r, c)),
        scratch_shapes=[pltpu.VMEM((th * wo, K * cin_eff), jnp.bfloat16)],
        compiler_params=pltpu.CompilerParams(
            dimension_semantics=("parallel", "parallel", "parallel"),
            # 48 MiB: headroom vs. v5e/v6e defaults, still under v7x's
            # 64 MiB/TC physical VMEM.  Actual per-step usage here is << 8 MiB.
            vmem_limit_bytes=48 * 1024 * 1024),
    )(*args)
    return out.reshape(n, ho, wo, cpad)


def basic_block(x_nhwc, params, *, stride=1, downsample=False):
    """Forward of the PyTorch BasicBlock.  x_nhwc: (N, H, W, Cin) f32."""
    n, h, w, cin = x_nhwc.shape
    cout = params["w1"].shape[0]
    if not downsample:
        # PyTorch contract: the identity path must match conv2's output shape.
        assert stride == 1 and cin == cout, \
            "downsample=True required when stride != 1 or Cin != Cout"

    x_bf = x_nhwc.astype(jnp.bfloat16)

    # conv1 + BN + ReLU  (emits channel-padded bf16, consumed as-is by conv2)
    out = conv_bn(x_bf, params["w1"], *params["bn1"], stride=stride, relu=True)

    if downsample:
        identity = conv_bn(x_bf, params["wd"], *params["bnd"],
                           stride=stride, relu=False)      # 1x1 conv + BN
    else:
        identity = x_bf

    # conv2 + BN, + identity, ReLU
    out = conv_bn(out, params["w2"], *params["bn2"], stride=1, relu=True,
                  residual=identity)

    # slice / cast back to the module's channel count & dtype once, at exit
    return out[..., :cout].astype(jnp.float32)


# ------------- precision-matched pure-JAX reference (correctness) -------------
def _ref_conv_bn(x_bf, w_oihw, gamma, beta, mean, var, *, stride=1, relu=False,
                 residual=None):
    w_scaled, bias = _fold_bn(w_oihw, gamma, beta, mean, var)
    pad = (w_oihw.shape[2] - 1) // 2
    w_hwio = jnp.transpose(w_scaled, (2, 3, 1, 0)).astype(jnp.bfloat16)
    y = jax.lax.conv_general_dilated(
        x_bf.astype(jnp.bfloat16), w_hwio, window_strides=(stride, stride),
        padding=[(pad, pad), (pad, pad)],
        dimension_numbers=("NHWC", "HWIO", "NHWC"),
        preferred_element_type=jnp.float32)
    y = y + bias
    if residual is not None:
        y = y + residual.astype(jnp.float32)
    if relu:
        y = jnp.maximum(y, 0.0)
    return y.astype(jnp.bfloat16)      # stages hand off bf16, like the kernel


def _ref_basic_block(x, params, *, stride=1, downsample=False):
    x_bf = x.astype(jnp.bfloat16)
    out = _ref_conv_bn(x_bf, params["w1"], *params["bn1"], stride=stride, relu=True)
    if downsample:
        identity = _ref_conv_bn(x_bf, params["wd"], *params["bnd"],
                                stride=stride, relu=False)
    else:
        identity = x_bf
    out = _ref_conv_bn(out, params["w2"], *params["bn2"], stride=1, relu=True,
                       residual=identity)
    return out.astype(jnp.float32)


def _bn_params(key, c):
    kg, kb, km, kv = jax.random.split(key, 4)
    gamma = 1.0 + 0.1 * jax.random.normal(kg, (c,), jnp.float32)
    beta = 0.1 * jax.random.normal(kb, (c,), jnp.float32)
    mean = 0.1 * jax.random.normal(km, (c,), jnp.float32)
    var = 1.0 + 0.1 * jax.random.uniform(kv, (c,), jnp.float32)
    return gamma, beta, mean, var


if __name__ == "__main__":
    key = jax.random.PRNGKey(0)
    kx, k1, k2, k3, kb1, kb2, kb3, kx2, k4, k5, kb4, kb5 = jax.random.split(key, 12)

    # --- Case 1: stride=2, downsample=True (projection shortcut) -------------
    N, Cin, H, W = 2, 4, 16, 16
    Cout, stride, downsample = 8, 2, True

    x_nchw = jax.random.normal(kx, (N, Cin, H, W), jnp.float32)
    x_nhwc = jnp.transpose(x_nchw, (0, 2, 3, 1))

    params = {
        "w1": 0.2 * jax.random.normal(k1, (Cout, Cin, 3, 3), jnp.float32),
        "w2": 0.2 * jax.random.normal(k2, (Cout, Cout, 3, 3), jnp.float32),
        "wd": 0.2 * jax.random.normal(k3, (Cout, Cin, 1, 1), jnp.float32),
        "bn1": _bn_params(kb1, Cout),
        "bn2": _bn_params(kb2, Cout),
        "bnd": _bn_params(kb3, Cout),
    }

    out = basic_block(x_nhwc, params, stride=stride, downsample=downsample)
    out = jax.block_until_ready(out)
    assert out.shape == (N, H // stride, W // stride, Cout), out.shape
    ref = _ref_basic_block(x_nhwc, params, stride=stride, downsample=downsample)
    err1 = float(jnp.max(jnp.abs(out - ref)))
    assert jnp.allclose(out, ref, atol=2e-2, rtol=2e-2), err1

    # --- Case 2: stride=1, identity shortcut ----------------------------------
    C2 = 8
    x2 = jnp.transpose(jax.random.normal(kx2, (N, C2, H, W), jnp.float32),
                       (0, 2, 3, 1))
    params2 = {
        "w1": 0.2 * jax.random.normal(k4, (C2, C2, 3, 3), jnp.float32),
        "w2": 0.2 * jax.random.normal(k5, (C2, C2, 3, 3), jnp.float32),
        "bn1": _bn_params(kb4, C2),
        "bn2": _bn_params(kb5, C2),
    }
    out2 = basic_block(x2, params2, stride=1, downsample=False)
    out2 = jax.block_until_ready(out2)
    assert out2.shape == (N, H, W, C2), out2.shape
    ref2 = _ref_basic_block(x2, params2, stride=1, downsample=False)
    err2 = float(jnp.max(jnp.abs(out2 - ref2)))
    assert jnp.allclose(out2, ref2, atol=2e-2, rtol=2e-2), err2

    print("KERNEL_OK")
</pallas_src>

<mosaic_0001>
module attributes {stable_mosaic.version = 11 : i64} {
  func.func @kernel(%arg0: i32, %arg1: i32, %arg2: i32, %arg3: memref<1x9x9x16xbf16, #tpu.memory_space<vmem>>, %arg4: memref<64x128xbf16, #tpu.memory_space<vmem>>, %arg5: memref<1x128xf32, #tpu.memory_space<vmem>>, %arg6: memref<1x64x128xbf16, #tpu.memory_space<vmem>>, %arg7: memref<64x64xbf16, #tpu.memory_space<vmem>>) attributes {dimension_semantics = [#tpu.dimension_semantics<parallel>, #tpu.dimension_semantics<parallel>, #tpu.dimension_semantics<parallel>], iteration_bounds = array<i64: 2, 1, 1>, scalar_prefetch = 0 : i64, scratch_operands = 1 : i64, tpu.core_type = #tpu.core_type<tc>, window_params = [{transform_indices = @transform_0, window_bounds = array<i64: 1, 9, 9, 16>}, {transform_indices = @transform_1, window_bounds = array<i64: 64, 128>}, {transform_indices = @transform_2, window_bounds = array<i64: 1, 128>}, {transform_indices = @transform_3, window_bounds = array<i64: 1, 64, 128>}]} {
    %c8_i32 = arith.constant 8 : i32
    %0 = arith.muli %arg2, %c8_i32 : i32
    %1 = tpu.assume_multiple %0, 8 : i32
    %c0_i32 = arith.constant 0 : i32
    %2 = arith.addi %1, %c0_i32 : i32
    %c0 = arith.constant 0 : index
    %3 = arith.index_cast %2 : i32 to index
    %c0_0 = arith.constant 0 : index
    %c0_1 = arith.constant 0 : index
    %4 = vector.load %arg3[%c0, %3, %c0_0, %c0_1] : memref<1x9x9x16xbf16, #tpu.memory_space<vmem>>, vector<1x8x8x16xbf16>
    %5 = vector.shape_cast %4 : vector<1x8x8x16xbf16> to vector<8x8x16xbf16>
    %6 = vector.shape_cast %5 : vector<8x8x16xbf16> to vector<64x16xbf16>
    %c0_2 = arith.constant 0 : index
    %c0_3 = arith.constant 0 : index
    %7 = vector.load %arg7[%c0_2, %c0_3] : memref<64x64xbf16, #tpu.memory_space<vmem>>, vector<64x16xbf16>
    tpu.vector_store %arg7[%c0_2, %c0_3], %6 {strides = array<i32>} : memref<64x64xbf16, #tpu.memory_space<vmem>>, vector<64x16xbf16>,
    %c0_i32_4 = arith.constant 0 : i32
    %8 = arith.addi %1, %c0_i32_4 : i32
    %c0_5 = arith.constant 0 : index
    %9 = arith.index_cast %8 : i32 to index
    %c1 = arith.constant 1 : index
    %c0_6 = arith.constant 0 : index
    %10 = vector.load %arg3[%c0_5, %9, %c1, %c0_6] : memref<1x9x9x16xbf16, #tpu.memory_space<vmem>>, vector<1x8x8x16xbf16>
    %11 = vector.shape_cast %10 : vector<1x8x8x16xbf16> to vector<8x8x16xbf16>
    %12 = vector.shape_cast %11 : vector<8x8x16xbf16> to vector<64x16xbf16>
    %c0_7 = arith.constant 0 : index
    %c16 = arith.constant 16 : index
    %13 = vector.load %arg7[%c0_7, %c16] : memref<64x64xbf16, #tpu.memory_space<vmem>>, vector<64x16xbf16>
    tpu.vector_store %arg7[%c0_7, %c16], %12 {strides = array<i32>} : memref<64x64xbf16, #tpu.memory_space<vmem>>, vector<64x16xbf16>,
    %c1_i32 = arith.constant 1 : i32
    %14 = arith.addi %1, %c1_i32 : i32
    %c0_8 = arith.constant 0 : index
    %15 = arith.index_cast %14 : i32 to index
    %c0_9 = arith.constant 0 : index
    %c0_10 = arith.constant 0 : index
    %16 = vector.load %arg3[%c0_8, %15, %c0_9, %c0_10] : memref<1x9x9x16xbf16, #tpu.memory_space<vmem>>, vector<1x8x8x16xbf16>
    %17 = vector.shape_cast %16 : vector<1x8x8x16xbf16> to vector<8x8x16xbf16>
    %18 = vector.shape_cast %17 : vector<8x8x16xbf16> to vector<64x16xbf16>
    %c0_11 = arith.constant 0 : index
    %c32 = arith.constant 32 : index
    %19 = vector.load %arg7[%c0_11, %c32] : memref<64x64xbf16, #tpu.memory_space<vmem>>, vector<64x16xbf16>
    tpu.vector_store %arg7[%c0_11, %c32], %18 {strides = array<i32>} : memref<64x64xbf16, #tpu.memory_space<vmem>>, vector<64x16xbf16>,
    %c1_i32_12 = arith.constant 1 : i32
    %20 = arith.addi %1, %c1_i32_12 : i32
    %c0_13 = arith.constant 0 : index
    %21 = arith.index_cast %20 : i32 to index
    %c1_14 = arith.constant 1 : index
    %c0_15 = arith.constant 0 : index
    %22 = vector.load %arg3[%c0_13, %21, %c1_14, %c0_15] : memref<1x9x9x16xbf16, #tpu.memory_space<vmem>>, vector<1x8x8x16xbf16>
    %23 = vector.shape_cast %22 : vector<1x8x8x16xbf16> to vector<8x8x16xbf16>
    %24 = vector.shape_cast %23 : vector<8x8x16xbf16> to vector<64x16xbf16>
    %c0_16 = arith.constant 0 : index
    %c48 = arith.constant 48 : index
    %25 = vector.load %arg7[%c0_16, %c48] : memref<64x64xbf16, #tpu.memory_space<vmem>>, vector<64x16xbf16>
    tpu.vector_store %arg7[%c0_16, %c48], %24 {strides = array<i32>} : memref<64x64xbf16, #tpu.memory_space<vmem>>, vector<64x16xbf16>,
    %c0_17 = arith.constant 0 : index
    %c0_18 = arith.constant 0 : index
    %26 = vector.load %arg7[%c0_17, %c0_18] : memref<64x64xbf16, #tpu.memory_space<vmem>>, vector<64x64xbf16>
    %c0_19 = arith.constant 0 : index
    %c0_20 = arith.constant 0 : index
    %27 = vector.load %arg4[%c0_19, %c0_20] : memref<64x128xbf16, #tpu.memory_space<vmem>>, vector<64x128xbf16>
    %cst = arith.constant dense<0.000000e+00> : vector<64x128xf32>
    %28 = tpu.matmul %26, %27, %cst {dimension_numbers = #tpu.dot_dimension_numbers<[1], [0], [0], [1], [0, 0, 1, 1], [], []>} : vector<64x64xbf16>, vector<64x128xbf16>, vector<64x128xf32> -> vector<64x128xf32>
    %c0_21 = arith.constant 0 : index
    %c0_22 = arith.constant 0 : index
    %29 = vector.load %arg5[%c0_21, %c0_22] : memref<1x128xf32, #tpu.memory_space<vmem>>, vector<1x128xf32>
    %30 = vector.broadcast %29 : vector<1x128xf32> to vector<64x128xf32>
    %31 = arith.addf %28, %30 : vector<64x128xf32>
    %cst_23 = arith.constant 0.000000e+00 : f32
    %32 = vector.broadcast %cst_23 : f32 to vector<64x128xf32>
    %33 = arith.maximumf %31, %32 : vector<64x128xf32>
    %34 = arith.truncf %33 : vector<64x128xf32> to vector<64x128xbf16>
    %c0_24 = arith.constant 0 : index
    %c0_25 = arith.constant 0 : index
    %c0_26 = arith.constant 0 : index
    %35 = vector.load %arg6[%c0_24, %c0_25, %c0_26] : memref<1x64x128xbf16, #tpu.memory_space<vmem>>, vector<1x64x128xbf16>
    %36 = vector.shape_cast %35 : vector<1x64x128xbf16> to vector<64x128xbf16>
    %37 = vector.shape_cast %34 : vector<64x128xbf16> to vector<1x64x128xbf16>
    tpu.vector_store %arg6[%c0_24, %c0_25, %c0_26], %37 {strides = array<i32>} : memref<1x64x128xbf16, #tpu.memory_space<vmem>>, vector<1x64x128xbf16>,
    return
  }
  func.func @transform_0(%arg0: i32, %arg1: i32, %arg2: i32) -> (i32, i32, i32, i32) {
    %c0_i32 = arith.constant 0 : i32
    %c0_i32_0 = arith.constant 0 : i32
    %c0_i32_1 = arith.constant 0 : i32
    %c0_i32_2 = arith.constant 0 : i32
    return %arg0, %c0_i32, %c0_i32_0, %c0_i32_1 : i32, i32, i32, i32
  }
  func.func @transform_1(%arg0: i32, %arg1: i32, %arg2: i32) -> (i32, i32) {
    %c0_i32 = arith.constant 0 : i32
    %c0_i32_0 = arith.constant 0 : i32
    return %c0_i32, %arg1 : i32, i32
  }
  func.func @transform_2(%arg0: i32, %arg1: i32, %arg2: i32) -> (i32, i32) {
    %c0_i32 = arith.constant 0 : i32
    %c0_i32_0 = arith.constant 0 : i32
    return %c0_i32, %arg1 : i32, i32
  }
  func.func @transform_3(%arg0: i32, %arg1: i32, %arg2: i32) -> (i32, i32, i32) {
    %c0_i32 = arith.constant 0 : i32
    return %arg0, %arg2, %arg1 : i32, i32, i32
  }
}

</mosaic_0001>

<llo_original>
// kernel: tpu_custom_call.1
$region0: #{tpu_custom_call.1}
  #allocation0 [shape = 'u32[]', space=smem, size = 0x4, offset = 0x4, fixed_abs, tag = 'smem constant byte address 0x4 - core index']
  #allocation1 [shape = 'u32[144,128]{1,0:T(1,128)}', space=vmem, size = 0x12000, scoped, tag = 'internal scratch']
  #allocation2 [shape = 'bf16[64,64]{1,0:T(16,128)(2,1)}', space=vmem, size = 0x4000, scoped, tag = 'scratch operand']
  %s0 = inlined_call_operand.vmem [shape: bf16[2,9,9,16], index: 0, kind: input, shape index: {}]
  %s1 = inlined_call_operand.vmem [shape: bf16[64,128], index: 1, kind: input, shape index: {}]
  %s2 = inlined_call_operand.vmem [shape: f32[1,128], index: 2, kind: input, shape index: {}]
  %s3 = inlined_call_operand.hbm [shape: bf16[2,64,128], index: 3, kind: output, shape index: {}]
  %s4 = sld [smem:[#allocation0]]
  $region45: #{tpu_custom_call.1} parent=0
    _
  %s6 = ssub.s32 1, %s4
  %s7 = scalar_select 0, %s6, %s4
  $region1: #{tpu_custom_call.1} parent=0
    #allocation3 [shape = 'u8[32768]{0}', space=vmem, size = 0x8000, scoped, tag = 'output window, operand 0']
    #allocation4 [shape = 's32[2]{0}', space=sflag, size = 0x8, scoped, tag = 'scoped memory for tpu_custom_call.1']
    %8 = vsyncpa [#allocation4], 0
    %s9 = scalar_lea.sflag [#allocation4], 1
    %10 = vsyncpa %s9, 0
    loop: start=0, step=1, limit=4
    $region2: #{tpu_custom_call.1} parent=1 // loop_pre_header
      _
    $region3: #{tpu_custom_call.1} parent=1 // loop_header
      %s12 = sphi 0, %s16
      %p13 = scmp.ge.s32.totalorder %s12, 4
      %s19 = sphi 0, %s38
      %s20 = sphi 0, %s34
      %s21 = sphi 0, %s30
      %s22 = sphi 0, %s19
      %s23 = sphi 0, %s20
      %s24 = sphi 0, %s21
      %s25 = sphi 0, %s22
      %s26 = sphi 0, %s23
      %s27 = sphi 0, %s24
      %s41 = sphi 0, %s43
      %s44 = sphi 0, %s41
      %s45 = sphi 0, %s44
      %s61 = sphi 0, %s45
      %s67 = sphi 0, %s69
      %s70 = sphi 0, %s67
      %s71 = sphi 0, %s70
      %s87 = sphi 0, %s71
      %s93 = sphi 0, %s95
      %s96 = sphi 0, %s93
      %s97 = sphi 0, %s96
      %s113 = sphi 0, %s97
      %s123 = sphi 0, %s125
      %s126 = sphi 0, %s123
      %s127 = sphi 0, %s126
      %s143 = sphi 0, %s127
    $region4: #{tpu_custom_call.1} parent=1 // loop_header_branch
      %15 = sbr.rel (%p13) target = $region8
    $region5: #{tpu_custom_call.1} parent=1 // loop_body
      %s17 = ssub.s32 %s12, 1
      %s18 = ssub.s32 %s12, 2
      %s28 = sadd.s32 1, %s21
      %p29 = scmp.ge.s32.totalorder %s28, 1
      %s30 = scalar_select %p29, 0, %s28
      %s31 = sadd.s32 1, %s20
      %s32 = scalar_select %p29, %s31, %s20
      %p33 = scmp.ge.s32.totalorder %s32, 1
      %s34 = scalar_select %p33, 0, %s32
      %s35 = sadd.s32 1, %s19
      %s36 = scalar_select %p33, %s35, %s19
      %p37 = scmp.ge.s32.totalorder %s36, 2
      %s38 = scalar_select %p37, 0, %s36
      %s39 = ssub.s32 %s19, %s38
      %p40 = scmp.eq.s32.totalorder %s39, 0
      %s42 = sadd.s32 %s41, 1
      %s43 = scalar_select %p40, %s41, %s42
      %p46 = pneg %p40
      %p47 = scmp.eq.s32.totalorder %s12, 1
      %p48 = por %p46, %p47
      %p49 = scmp.ne.s32.totalorder %s41, %s44
      %p50 = scmp.eq.s32.totalorder %s12, 0
      %p51 = por %p49, %p50
      %p52 = scmp.ne.s32.totalorder %s41, %s44
      %p53 = scmp.eq.s32.totalorder %s17, 1
      %p54 = por %p52, %p53
      %p55 = scmp.ne.s32.totalorder %s44, %s45
      %p56 = scmp.eq.s32.totalorder %s17, 0
      %p57 = por %p55, %p56
      %p58 = scmp.ne.s32.totalorder %s44, %s45
      %p59 = scmp.eq.s32.totalorder %s18, 1
      %p60 = por %p58, %p59
      %p62 = scmp.ne.s32.totalorder %s45, %s61
      %p63 = scmp.eq.s32.totalorder %s18, 0
      %p64 = por %p62, %p63
      %s65 = ssub.s32 %s20, %s34
      %p66 = scmp.eq.s32.totalorder %s65, 0
      %s68 = sadd.s32 %s67, 1
      %s69 = scalar_select %p66, %s67, %s68
      %p72 = pneg %p66
      %p73 = scmp.eq.s32.totalorder %s12, 1
      %p74 = por %p72, %p73
      %p75 = scmp.ne.s32.totalorder %s67, %s70
      %p76 = scmp.eq.s32.totalorder %s12, 0
      %p77 = por %p75, %p76
      %p78 = scmp.ne.s32.totalorder %s67, %s70
      %p79 = scmp.eq.s32.totalorder %s17, 1
      %p80 = por %p78, %p79
      %p81 = scmp.ne.s32.totalorder %s70, %s71
      %p82 = scmp.eq.s32.totalorder %s17, 0
      %p83 = por %p81, %p82
      %p84 = scmp.ne.s32.totalorder %s70, %s71
      %p85 = scmp.eq.s32.totalorder %s18, 1
      %p86 = por %p84, %p85
      %p88 = scmp.ne.s32.totalorder %s71, %s87
      %p89 = scmp.eq.s32.totalorder %s18, 0
      %p90 = por %p88, %p89
      %s91 = ssub.s32 %s20, %s34
      %p92 = scmp.eq.s32.totalorder %s91, 0
      %s94 = sadd.s32 %s93, 1
      %s95 = scalar_select %p92, %s93, %s94
      %p98 = pneg %p92
      %p99 = scmp.eq.s32.totalorder %s12, 1
      %p100 = por %p98, %p99
      %p101 = scmp.ne.s32.totalorder %s93, %s96
      %p102 = scmp.eq.s32.totalorder %s12, 0
      %p103 = por %p101, %p102
      %p104 = scmp.ne.s32.totalorder %s93, %s96
      %p105 = scmp.eq.s32.totalorder %s17, 1
      %p106 = por %p104, %p105
      %p107 = scmp.ne.s32.totalorder %s96, %s97
      %p108 = scmp.eq.s32.totalorder %s17, 0
      %p109 = por %p107, %p108
      %p110 = scmp.ne.s32.totalorder %s96, %s97
      %p111 = scmp.eq.s32.totalorder %s18, 1
      %p112 = por %p110, %p111
      %p114 = scmp.ne.s32.totalorder %s97, %s113
      %p115 = scmp.eq.s32.totalorder %s18, 0
      %p116 = por %p114, %p115
      %s117 = ssub.s32 %s19, %s38
      %s118 = ssub.s32 %s21, %s30
      %s119 = sor.u32 %s117, %s118
      %s120 = ssub.s32 %s20, %s34
      %s121 = sor.u32 %s119, %s120
      %p122 = scmp.eq.s32.totalorder %s121, 0
      %s124 = sadd.s32 %s123, 1
      %s125 = scalar_select %p122, %s123, %s124
      %p128 = pneg %p122
      %p129 = scmp.eq.s32.totalorder %s12, 1
      %p130 = por %p128, %p129
      %p131 = scmp.ne.s32.totalorder %s123, %s126
      %p132 = scmp.eq.s32.totalorder %s12, 0
      %p133 = por %p131, %p132
      %p134 = scmp.ne.s32.totalorder %s123, %s126
      %p135 = scmp.eq.s32.totalorder %s17, 1
      %p136 = por %p134, %p135
      %p137 = scmp.ne.s32.totalorder %s126, %s127
      %p138 = scmp.eq.s32.totalorder %s17, 0
      %p139 = por %p137, %p138
      %p140 = scmp.ne.s32.totalorder %s126, %s127
      %p141 = scmp.eq.s32.totalorder %s18, 1
      %p142 = por %p140, %p141
      %p144 = scmp.ne.s32.totalorder %s127, %s143
      %p145 = scmp.eq.s32.totalorder %s18, 0
      %p146 = por %p144, %p145
      %p147 = scmp.le.s32.totalorder 1, %s12
      %p148 = scmp.lt.s32.totalorder %s12, 3
      %p149 = pnand %p147, %p148
      %p150 = pneg %p149
      // Predicated region
      $region9: #{tpu_custom_call.1} parent=5 // pred_check
        _
      $region10: #{tpu_custom_call.1} parent=5 // pred_check_branch
        %152 = sbr.rel (%p149) target = $region12
      $region11: #{tpu_custom_call.1} parent=5 // pred_region
        %s153 = ssub.s32 %s12, 1
        // Predicated region
        $region13: #{tpu_custom_call.1} parent=11 // pred_check
          %p154 = pneg %p83
        $region14: #{tpu_custom_call.1} parent=11 // pred_check_branch
          %156 = sbr.rel (%p154) target = $region16
        $region15: #{tpu_custom_call.1} parent=11 // pred_region
          %p157 = scmp.lt.s32.totalorder %s23, 0
          %s158 = scalar_select %p157, %s23, 0
          %s159 = smul.addr %s158, 4
          %s160 = scalar_lea.vmem %s1, %s159
        $region16: #{tpu_custom_call.1} parent=11 // pred_fallthru
          _
        // Predicated region
        $region17: #{tpu_custom_call.1} parent=11 // pred_check
          %p161 = pneg %p109
        $region18: #{tpu_custom_call.1} parent=11 // pred_check_branch
          %163 = sbr.rel (%p161) target = $region20
        $region19: #{tpu_custom_call.1} parent=11 // pred_region
          %p164 = scmp.lt.s32.totalorder %s23, 0
          %s165 = scalar_select %p164, %s23, 0
          %s166 = scalar_lea.vmem %s2, %s165
        $region20: #{tpu_custom_call.1} parent=11 // pred_fallthru
          _
      $region12: #{tpu_custom_call.1} parent=5 // pred_fallthru
        _
      %p167 = scmp.lt.s32.totalorder %s12, 2
      // Predicated region
      $region21: #{tpu_custom_call.1} parent=5 // pred_check
        %p168 = pneg %p167
      $region22: #{tpu_custom_call.1} parent=5 // pred_check_branch
        %170 = sbr.rel (%p168) target = $region24
      $region23: #{tpu_custom_call.1} parent=5 // pred_region
        // Predicated region
        $region25: #{tpu_custom_call.1} parent=23 // pred_check
          %p171 = pneg %p51
        $region26: #{tpu_custom_call.1} parent=23 // pred_check_branch
          %173 = sbr.rel (%p171) target = $region28
        $region27: #{tpu_custom_call.1} parent=23 // pred_region
          %p174 = scmp.lt.s32.totalorder %s19, 1
          %s175 = scalar_select %p174, %s19, 1
          %s176 = smul.addr %s175, 18
          %s177 = smul.addr %s176, 4
          %s178 = scalar_lea.vmem %s0, %s177
        $region28: #{tpu_custom_call.1} parent=23 // pred_fallthru
          _
      $region24: #{tpu_custom_call.1} parent=5 // pred_fallthru
        _
      %p179 = scmp.le.s32.totalorder 1, %s12
      %p180 = scmp.lt.s32.totalorder %s12, 3
      %p181 = pnand %p179, %p180
      %p182 = pneg %p181
      // Predicated region
      $region29: #{tpu_custom_call.1} parent=5 // pred_check
        _
      $region30: #{tpu_custom_call.1} parent=5 // pred_check_branch
        %184 = sbr.rel (%p181) target = $region32
      $region31: #{tpu_custom_call.1} parent=5 // pred_region
        %s185 = ssub.s32 %s12, 1
        %p186 = scmp.lt.s32.totalorder %s22, 1
        %s187 = scalar_select %p186, %s22, 1
        %s188 = smul.addr %s187, 18
        %s189 = smul.addr %s188, 4
        %s190 = scalar_lea.vmem %s0, %s189
        %p191 = pneg %p57
        %p192 = pneg %p54
        %p193 = scmp.lt.s32.totalorder %s23, 0
        %s194 = scalar_select %p193, %s23, 0
        %s195 = smul.addr %s194, 4
        %s196 = scalar_lea.vmem %s1, %s195
        %p197 = pneg %p83
        %p198 = pneg %p80
        %p199 = scmp.lt.s32.totalorder %s23, 0
        %s200 = scalar_select %p199, %s23, 0
        %s201 = scalar_lea.vmem %s2, %s200
        %p202 = pneg %p109
        %p203 = pneg %p106
        %p204 = pneg %p139
        %p205 = pneg %p136
        %s206 = sand.u32 %s126, 1
        %s207 = scalar_lea.sflag [#allocation4], %s206
        %s208 = sand.u32 %s126, 1
        %s209 = smul.addr %s208, 32
        %s210 = scalar_lea.vmem [#allocation3], %s209
        %p211 = scmp.lt.s32.totalorder %s22, 1
        %s212 = scalar_select %p211, %s22, 1
        %s213 = smul.addr %s212, 18
        %s214 = smul.addr %s213, 4
        %s215 = scalar_lea.vmem %s0, %s214
        %p216 = scmp.lt.s32.totalorder %s23, 0
        %s217 = scalar_select %p216, %s23, 0
        %s218 = smul.addr %s217, 4
        %s219 = scalar_lea.vmem %s1, %s218
        %p220 = scmp.lt.s32.totalorder %s23, 0
        %s221 = scalar_select %p220, %s23, 0
        %s222 = scalar_lea.vmem %s2, %s221
        %s223 = smul.u32 8, %s24
        %s225 = smul.u32 %s24, 8
        %s226 = smul.u32 %s225, 2
        %s227 = smul.addr %s226, 4
        %s228 = scalar_lea.vmem %s215, %s227
        %v229 = vld [vmem:[%s228] sm:$0xf]
        %v230 = vld [vmem:[%s228 + $0x8] sm:$0xf]
        %v231 = vld [vmem:[%s228 + $0x10] sm:$0xf]
        %v232 = vld [vmem:[%s228 + $0x18] sm:$0xf]
        %v233 = vld [vmem:[%s228 + $0x20] sm:$0xf]
        %v234 = vld [vmem:[%s228 + $0x28] sm:$0xf]
        %v235 = vld [vmem:[%s228 + $0x30] sm:$0xf]
        %v236 = vld [vmem:[%s228 + $0x38] sm:$0xf]
        %v245 = vunpack.c.l.b16 %v229
        %v246 = vunpack.c.l.b16 %v230
        %v247 = vunpack.c.l.b16 %v231
        %v248 = vunpack.c.l.b16 %v232
        %v249 = vunpack.c.l.b16 %v233
        %v250 = vunpack.c.l.b16 %v234
        %v251 = vunpack.c.l.b16 %v235
        %v252 = vunpack.c.l.b16 %v236
        %v253 = vpack.c.b16 %v246, %v245
        %v254 = vpack.c.b16 %v248, %v247
        %v255 = vpack.c.b16 %v250, %v249
        %v256 = vpack.c.b16 %v252, %v251
        %vm261 = vcmask 130048
        %262 = vst.msk [vmem:[#allocation2] sm:$0xff] %vm261, %v253
        %263 = vst.msk [vmem:[#allocation2 + $0x8] sm:$0xff] %vm261, %v254
        %264 = vst.msk [vmem:[#allocation2 + $0x10] sm:$0xff] %vm261, %v255
        %265 = vst.msk [vmem:[#allocation2 + $0x18] sm:$0xff] %vm261, %v256
        %v266 = vld [vmem:[%s228] sm:$0xf]
        %v267 = vld [vmem:[%s228 + $0x4] sm:$0x1]
        %v268 = vld [vmem:[%s228 + $0x8] sm:$0xf]
        %v269 = vld [vmem:[%s228 + $0xc] sm:$0x1]
        %v270 = vld [vmem:[%s228 + $0x10] sm:$0xf]
        %v271 = vld [vmem:[%s228 + $0x14] sm:$0x1]
        %v272 = vld [vmem:[%s228 + $0x18] sm:$0xf]
        %v273 = vld [vmem:[%s228 + $0x1c] sm:$0x1]
        %v274 = vld [vmem:[%s228 + $0x20] sm:$0xf]
        %v275 = vld [vmem:[%s228 + $0x24] sm:$0x1]
        %v276 = vld [vmem:[%s228 + $0x28] sm:$0xf]
        %v277 = vld [vmem:[%s228 + $0x2c] sm:$0x1]
        %v278 = vld [vmem:[%s228 + $0x30] sm:$0xf]
        %v279 = vld [vmem:[%s228 + $0x34] sm:$0x1]
        %v280 = vld [vmem:[%s228 + $0x38] sm:$0xf]
        %v281 = vld [vmem:[%s228 + $0x3c] sm:$0x1]
        %vm282 = vsmask.f32 3328
        %vm283 = vsmask.f32 7440
        %vm284 = vmor %vm282, %vm283
        %v286 = vshrl.u32 %v266, 16
        %v288 = vrot.slane %v286, 4
        %v289 = vshll.u32 %v266, 16
        %v291 = vrot.slane %v289, 5
        %v292 = vor.u32 %v288, %v291
        %v293 = vrot.slane %v292, 4
        %v295 = vshll.u32 %v267, 16
        %v297 = vrot.slane %v295, 5
        %v298 = vsel %vm284, %v293, %v297
        %v300 = vshrl.u32 %v268, 16
        %v302 = vrot.slane %v300, 4
        %v303 = vshll.u32 %v268, 16
        %v305 = vrot.slane %v303, 5
        %v306 = vor.u32 %v302, %v305
        %v307 = vrot.slane %v306, 4
        %v309 = vshll.u32 %v269, 16
        %v311 = vrot.slane %v309, 5
        %v312 = vsel %vm284, %v307, %v311
        %v314 = vshrl.u32 %v270, 16
        %v316 = vrot.slane %v314, 4
        %v317 = vshll.u32 %v270, 16
        %v319 = vrot.slane %v317, 5
        %v320 = vor.u32 %v316, %v319
        %v321 = vrot.slane %v320, 4
        %v323 = vshll.u32 %v271, 16
        %v325 = vrot.slane %v323, 5
        %v326 = vsel %vm284, %v321, %v325
        %v328 = vshrl.u32 %v272, 16
        %v330 = vrot.slane %v328, 4
        %v331 = vshll.u32 %v272, 16
        %v333 = vrot.slane %v331, 5
        %v334 = vor.u32 %v330, %v333
        %v335 = vrot.slane %v334, 4
        %v337 = vshll.u32 %v273, 16
        %v339 = vrot.slane %v337, 5
        %v340 = vsel %vm284, %v335, %v339
        %v342 = vshrl.u32 %v274, 16
        %v344 = vrot.slane %v342, 4
        %v345 = vshll.u32 %v274, 16
        %v347 = vrot.slane %v345, 5
        %v348 = vor.u32 %v344, %v347
        %v349 = vrot.slane %v348, 4
        %v351 = vshll.u32 %v275, 16
        %v353 = vrot.slane %v351, 5
        %v354 = vsel %vm284, %v349, %v353
        %v356 = vshrl.u32 %v276, 16
        %v358 = vrot.slane %v356, 4
        %v359 = vshll.u32 %v276, 16
        %v361 = vrot.slane %v359, 5
        %v362 = vor.u32 %v358, %v361
        %v363 = vrot.slane %v362, 4
        %v365 = vshll.u32 %v277, 16
        %v367 = vrot.slane %v365, 5
        %v368 = vsel %vm284, %v363, %v367
        %v370 = vshrl.u32 %v278, 16
        %v372 = vrot.slane %v370, 4
        %v373 = vshll.u32 %v278, 16
        %v375 = vrot.slane %v373, 5
        %v376 = vor.u32 %v372, %v375
        %v377 = vrot.slane %v376, 4
        %v379 = vshll.u32 %v279, 16
        %v381 = vrot.slane %v379, 5
        %v382 = vsel %vm284, %v377, %v381
        %v384 = vshrl.u32 %v280, 16
        %v386 = vrot.slane %v384, 4
        %v387 = vshll.u32 %v280, 16
        %v389 = vrot.slane %v387, 5
        %v390 = vor.u32 %v386, %v389
        %v391 = vrot.slane %v390, 4
        %v393 = vshll.u32 %v281, 16
        %v395 = vrot.slane %v393, 5
        %v396 = vsel %vm284, %v391, %v395
        %v397 = vunpack.c.l.b16 %v298
        %v398 = vunpack.c.l.b16 %v312
        %v399 = vunpack.c.l.b16 %v326
        %v400 = vunpack.c.l.b16 %v340
        %v401 = vunpack.c.l.b16 %v354
        %v402 = vunpack.c.l.b16 %v368
        %v403 = vunpack.c.l.b16 %v382
        %v404 = vunpack.c.l.b16 %v396
        %v405 = vpack.c.b16 %v398, %v397
        %v406 = vpack.c.b16 %v400, %v399
        %v407 = vpack.c.b16 %v402, %v401
        %v408 = vpack.c.b16 %v404, %v403
        %409 = vrot.lane.b32.xlu0 %v405, 16
        %v410 = vpop.permute.xlu0 %409
        %411 = vrot.lane.b32.xlu0 %v406, 16
        %v412 = vpop.permute.xlu0 %411
        %413 = vrot.lane.b32.xlu0 %v407, 16
        %v414 = vpop.permute.xlu0 %413
        %415 = vrot.lane.b32.xlu0 %v408, 16
        %v416 = vpop.permute.xlu0 %415
        %vm421 = vcmask 261248
        %422 = vst.msk [vmem:[#allocation2] sm:$0xff] %vm421, %v410
        %423 = vst.msk [vmem:[#allocation2 + $0x8] sm:$0xff] %vm421, %v412
        %424 = vst.msk [vmem:[#allocation2 + $0x10] sm:$0xff] %vm421, %v414
        %425 = vst.msk [vmem:[#allocation2 + $0x18] sm:$0xff] %vm421, %v416
        %s426 = sadd.s32 %s225, 1
        %s427 = smul.u32 %s426, 2
        %s428 = smul.addr %s427, 4
        %s429 = scalar_lea.vmem %s215, %s428
        %v430 = vld [vmem:[%s429] sm:$0xf]
        %v431 = vld [vmem:[%s429 + $0x8] sm:$0xf]
        %v432 = vld [vmem:[%s429 + $0x10] sm:$0xf]
        %v433 = vld [vmem:[%s429 + $0x18] sm:$0xf]
        %v434 = vld [vmem:[%s429 + $0x20] sm:$0xf]
        %v435 = vld [vmem:[%s429 + $0x28] sm:$0xf]
        %v436 = vld [vmem:[%s429 + $0x30] sm:$0xf]
        %v437 = vld [vmem:[%s429 + $0x38] sm:$0xf]
        %v446 = vunpack.c.l.b16 %v430
        %v447 = vunpack.c.l.b16 %v431
        %v448 = vunpack.c.l.b16 %v432
        %v449 = vunpack.c.l.b16 %v433
        %v450 = vunpack.c.l.b16 %v434
        %v451 = vunpack.c.l.b16 %v435
        %v452 = vunpack.c.l.b16 %v436
        %v453 = vunpack.c.l.b16 %v437
        %v454 = vpack.c.b16 %v447, %v446
        %v455 = vpack.c.b16 %v449, %v448
        %v456 = vpack.c.b16 %v451, %v450
        %v457 = vpack.c.b16 %v453, %v452
        %458 = vrot.lane.b32.xlu0 %v454, 32
        %v459 = vpop.permute.xlu0 %458
        %460 = vrot.lane.b32.xlu0 %v455, 32
        %v461 = vpop.permute.xlu0 %460
        %462 = vrot.lane.b32.xlu0 %v456, 32
        %v463 = vpop.permute.xlu0 %462
        %464 = vrot.lane.b32.xlu0 %v457, 32
        %v465 = vpop.permute.xlu0 %464
        %vm470 = vcmask 392448
        %471 = vst.msk [vmem:[#allocation2] sm:$0xff] %vm470, %v459
        %472 = vst.msk [vmem:[#allocation2 + $0x8] sm:$0xff] %vm470, %v461
        %473 = vst.msk [vmem:[#allocation2 + $0x10] sm:$0xff] %vm470, %v463
        %474 = vst.msk [vmem:[#allocation2 + $0x18] sm:$0xff] %vm470, %v465
        %v475 = vld [vmem:[%s429] sm:$0xf]
        %v476 = vld [vmem:[%s429 + $0x4] sm:$0x1]
        %v477 = vld [vmem:[%s429 + $0x8] sm:$0xf]
        %v478 = vld [vmem:[%s429 + $0xc] sm:$0x1]
        %v479 = vld [vmem:[%s429 + $0x10] sm:$0xf]
        %v480 = vld [vmem:[%s429 + $0x14] sm:$0x1]
        %v481 = vld [vmem:[%s429 + $0x18] sm:$0xf]
        %v482 = vld [vmem:[%s429 + $0x1c] sm:$0x1]
        %v483 = vld [vmem:[%s429 + $0x20] sm:$0xf]
        %v484 = vld [vmem:[%s429 + $0x24] sm:$0x1]
        %v485 = vld [vmem:[%s429 + $0x28] sm:$0xf]
        %v486 = vld [vmem:[%s429 + $0x2c] sm:$0x1]
        %v487 = vld [vmem:[%s429 + $0x30] sm:$0xf]
        %v488 = vld [vmem:[%s429 + $0x34] sm:$0x1]
        %v489 = vld [vmem:[%s429 + $0x38] sm:$0xf]
        %v490 = vld [vmem:[%s429 + $0x3c] sm:$0x1]
        %v492 = vshrl.u32 %v475, 16
        %v494 = vrot.slane %v492, 4
        %v495 = vshll.u32 %v475, 16
        %v497 = vrot.slane %v495, 5
        %v498 = vor.u32 %v494, %v497
        %v499 = vrot.slane %v498, 4
        %v501 = vshll.u32 %v476, 16
        %v503 = vrot.slane %v501, 5
        %v504 = vsel %vm284, %v499, %v503
        %v506 = vshrl.u32 %v477, 16
        %v508 = vrot.slane %v506, 4
        %v509 = vshll.u32 %v477, 16
        %v511 = vrot.slane %v509, 5
        %v512 = vor.u32 %v508, %v511
        %v513 = vrot.slane %v512, 4
        %v515 = vshll.u32 %v478, 16
        %v517 = vrot.slane %v515, 5
        %v518 = vsel %vm284, %v513, %v517
        %v520 = vshrl.u32 %v479, 16
        %v522 = vrot.slane %v520, 4
        %v523 = vshll.u32 %v479, 16
        %v525 = vrot.slane %v523, 5
        %v526 = vor.u32 %v522, %v525
        %v527 = vrot.slane %v526, 4
        %v529 = vshll.u32 %v480, 16
        %v531 = vrot.slane %v529, 5
        %v532 = vsel %vm284, %v527, %v531
        %v534 = vshrl.u32 %v481, 16
        %v536 = vrot.slane %v534, 4
        %v537 = vshll.u32 %v481, 16
        %v539 = vrot.slane %v537, 5
        %v540 = vor.u32 %v536, %v539
        %v541 = vrot.slane %v540, 4
        %v543 = vshll.u32 %v482, 16
        %v545 = vrot.slane %v543, 5
        %v546 = vsel %vm284, %v541, %v545
        %v548 = vshrl.u32 %v483, 16
        %v550 = vrot.slane %v548, 4
        %v551 = vshll.u32 %v483, 16
        %v553 = vrot.slane %v551, 5
        %v554 = vor.u32 %v550, %v553
        %v555 = vrot.slane %v554, 4
        %v557 = vshll.u32 %v484, 16
        %v559 = vrot.slane %v557, 5
        %v560 = vsel %vm284, %v555, %v559
        %v562 = vshrl.u32 %v485, 16
        %v564 = vrot.slane %v562, 4
        %v565 = vshll.u32 %v485, 16
        %v567 = vrot.slane %v565, 5
        %v568 = vor.u32 %v564, %v567
        %v569 = vrot.slane %v568, 4
        %v571 = vshll.u32 %v486, 16
        %v573 = vrot.slane %v571, 5
        %v574 = vsel %vm284, %v569, %v573
        %v576 = vshrl.u32 %v487, 16
        %v578 = vrot.slane %v576, 4
        %v579 = vshll.u32 %v487, 16
        %v581 = vrot.slane %v579, 5
        %v582 = vor.u32 %v578, %v581
        %v583 = vrot.slane %v582, 4
        %v585 = vshll.u32 %v488, 16
        %v587 = vrot.slane %v585, 5
        %v588 = vsel %vm284, %v583, %v587
        %v590 = vshrl.u32 %v489, 16
        %v592 = vrot.slane %v590, 4
        %v593 = vshll.u32 %v489, 16
        %v595 = vrot.slane %v593, 5
        %v596 = vor.u32 %v592, %v595
        %v597 = vrot.slane %v596, 4
        %v599 = vshll.u32 %v490, 16
        %v601 = vrot.slane %v599, 5
        %v602 = vsel %vm284, %v597, %v601
        %v603 = vunpack.c.l.b16 %v504
        %v604 = vunpack.c.l.b16 %v518
        %v605 = vunpack.c.l.b16 %v532
        %v606 = vunpack.c.l.b16 %v546
        %v607 = vunpack.c.l.b16 %v560
        %v608 = vunpack.c.l.b16 %v574
        %v609 = vunpack.c.l.b16 %v588
        %v610 = vunpack.c.l.b16 %v602
        %v611 = vpack.c.b16 %v604, %v603
        %v612 = vpack.c.b16 %v606, %v605
        %v613 = vpack.c.b16 %v608, %v607
        %v614 = vpack.c.b16 %v610, %v609
        %615 = vrot.lane.b32.xlu0 %v611, 48
        %v616 = vpop.permute.xlu0 %615
        %617 = vrot.lane.b32.xlu0 %v612, 48
        %v618 = vpop.permute.xlu0 %617
        %619 = vrot.lane.b32.xlu0 %v613, 48
        %v620 = vpop.permute.xlu0 %619
        %621 = vrot.lane.b32.xlu0 %v614, 48
        %v622 = vpop.permute.xlu0 %621
        %vm627 = vcmask 523648
        %628 = vst.msk [vmem:[#allocation2] sm:$0xff] %vm627, %v616
        %629 = vst.msk [vmem:[#allocation2 + $0x8] sm:$0xff] %vm627, %v618
        %630 = vst.msk [vmem:[#allocation2 + $0x10] sm:$0xff] %vm627, %v620
        %631 = vst.msk [vmem:[#allocation2 + $0x18] sm:$0xff] %vm627, %v622
        %v632 = vld [vmem:[#allocation2] sm:$0xff]
        %v633 = vld [vmem:[#allocation2 + $0x8] sm:$0xff]
        %v634 = vld [vmem:[#allocation2 + $0x10] sm:$0xff]
        %v635 = vld [vmem:[#allocation2 + $0x18] sm:$0xff]
        %v636 = vld [vmem:[%s219] sm:$0xf]
        %v637 = vld [vmem:[%s219 + $0x4] sm:$0xf]
        %v638 = vld [vmem:[%s219 + $0x8] sm:$0xf]
        %v639 = vld [vmem:[%s219 + $0xc] sm:$0xf]
        %v640 = vld [vmem:[%s219 + $0x10] sm:$0xf]
        %v641 = vld [vmem:[%s219 + $0x14] sm:$0xf]
        %v642 = vld [vmem:[%s219 + $0x18] sm:$0xf]
        %v643 = vld [vmem:[%s219 + $0x1c] sm:$0xf]
        %v644 = vld [vmem:[%s222] sm:$0x1]
        %v646 = vlaneseq
        %v647 = vshrl.u32 %v646, 7
        %v648 = vsub.s32 0, %v647
        %v649 = vrot.slane %v644, %v648
        %v659 = vunpack.c.l.b16 %v636
        %v660 = vunpack.c.l.b16 %v637
        %v661 = vunpack.c.l.b16 %v638
        %v662 = vunpack.c.l.b16 %v639
        %v663 = vunpack.c.l.b16 %v640
        %v664 = vunpack.c.l.b16 %v641
        %v665 = vunpack.c.l.b16 %v642
        %v666 = vunpack.c.l.b16 %v643
        %v667 = vpack.c.b16 %v660, %v659
        %v668 = vpack.c.b16 %v662, %v661
        %v669 = vpack.c.b16 %v664, %v663
        %v670 = vpack.c.b16 %v666, %v665
        %vm675 = vcmask 523264
        %v677 = vsel %vm675, %v632, 0
        %v680 = vsel %vm675, %v633, 0
        %v683 = vsel %vm675, %v634, 0
        %v686 = vsel %vm675, %v635, 0
        %688 = vmatprep.subr.bf16.mxu0 0
        %689 = vmatpush1.bf16.msra.mxu0 %v667
        %690 = vmatprep.subr.bf16.mxu0 0
        %691 = vmatpush1.bf16.msra.mxu0 %v668
        %692 = vmatprep.subr.bf16.mxu0 0
        %693 = vmatpush1.bf16.msra.mxu0 %v669
        %694 = vmatprep.subr.bf16.mxu0 0
        %695 = vmatpush1.bf16.msra.mxu0 %v670
        %696 = vmatprep.subr.bf16.mxu0 0
        %697 = vmatpush1.bf16.msra.mxu0 0
        %698 = vmatprep.subr.bf16.mxu0 0
        %699 = vmatpush1.bf16.msra.mxu0 0
        %700 = vmatprep.subr.bf16.mxu0 0
        %701 = vmatpush1.bf16.msra.mxu0 0
        %702 = vmatprep.subr.bf16.mxu0 0
        %703 = vmatpush1.bf16.msra.mxu0 0
        %704 = vmatprep.subr.bf16.mxu0 0
        %705 = vmatpush1.bf16.msra.mxu0 0
        %706 = vmatprep.subr.bf16.mxu0 0
        %707 = vmatpush1.bf16.msra.mxu0 0
        %708 = vmatprep.subr.bf16.mxu0 0
        %709 = vmatpush1.bf16.msra.mxu0 0
        %710 = vmatprep.subr.bf16.mxu0 0
        %711 = vmatpush1.bf16.msra.mxu0 0
        %712 = vmatprep.subr.bf16.mxu0 0
        %713 = vmatpush1.bf16.msra.mxu0 0
        %714 = vmatprep.subr.bf16.mxu0 0
        %715 = vmatpush1.bf16.msra.mxu0 0
        %716 = vmatprep.subr.bf16.mxu0 0
        %717 = vmatpush1.bf16.msra.mxu0 0
        %718 = vmatprep.subr.bf16.mxu0 0
        %719 = vmatpush1.bf16.msra.mxu0 0
        %720 = vmatprep.mubr.bf16.mxu0 0
        %721 = vmatmul.mubr.bf16.gmra.mrb[0].mxu0 %v677
        %v722 = vpop.f32.mrb[0].mxu0
        %v723 = vadd.f32 %v649, %v722
        %v724 = vpop.f32.mrb[0].mxu0
        %v725 = vpop.f32.mrb[0].mxu0
        %v726 = vadd.f32 %v649, %v725
        %v727 = vpop.f32.mrb[0].mxu0
        %728 = vmatprep.mubr.bf16.mxu0 0
        %729 = vmatmul.mubr.bf16.gmra.mrb[0].mxu0 %v680
        %v730 = vpop.f32.mrb[0].mxu0
        %v731 = vadd.f32 %v649, %v730
        %v732 = vpop.f32.mrb[0].mxu0
        %v733 = vpop.f32.mrb[0].mxu0
        %v734 = vadd.f32 %v649, %v733
        %v735 = vpop.f32.mrb[0].mxu0
        %736 = vmatprep.mubr.bf16.mxu0 0
        %737 = vmatmul.mubr.bf16.gmra.mrb[0].mxu0 %v683
        %v738 = vpop.f32.mrb[0].mxu0
        %v739 = vadd.f32 %v649, %v738
        %v740 = vpop.f32.mrb[0].mxu0
        %v741 = vpop.f32.mrb[0].mxu0
        %v742 = vadd.f32 %v649, %v741
        %v743 = vpop.f32.mrb[0].mxu0
        %744 = vmatprep.mubr.bf16.mxu0 0
        %745 = vmatmul.mubr.bf16.gmra.mrb[0].mxu0 %v686
        %v746 = vpop.f32.mrb[0].mxu0
        %v747 = vadd.f32 %v649, %v746
        %v748 = vpop.f32.mrb[0].mxu0
        %v749 = vpop.f32.mrb[0].mxu0
        %v750 = vadd.f32 %v649, %v749
        %v751 = vpop.f32.mrb[0].mxu0
        %752 = vdwg.mxu0
        %v753 = vmax.f32 %v723, 0.0
        %v754 = vmax.f32 %v726, 0.0
        %v755 = vmax.f32 %v731, 0.0
        %v756 = vmax.f32 %v734, 0.0
        %v757 = vmax.f32 %v739, 0.0
        %v758 = vmax.f32 %v742, 0.0
        %v759 = vmax.f32 %v747, 0.0
        %v760 = vmax.f32 %v750, 0.0
        %v761 = vpack.c.bf16 %v754, %v753
        %v762 = vpack.c.bf16 %v756, %v755
        %v763 = vpack.c.bf16 %v758, %v757
        %v764 = vpack.c.bf16 %v760, %v759
        %v769 = vunpack.c.l.b16 %v761
        %v770 = vunpack.c.h.b16 %v761
        %v771 = vunpack.c.l.b16 %v762
        %v772 = vunpack.c.h.b16 %v762
        %v773 = vunpack.c.l.b16 %v763
        %v774 = vunpack.c.h.b16 %v763
        %v775 = vunpack.c.l.b16 %v764
        %v776 = vunpack.c.h.b16 %v764
        %v777 = vpack.c.b16 %v769, %v769
        %v778 = vpack.c.b16 %v770, %v770
        %v779 = vpack.c.b16 %v771, %v771
        %v780 = vpack.c.b16 %v772, %v772
        %v781 = vpack.c.b16 %v773, %v773
        %v782 = vpack.c.b16 %v774, %v774
        %v783 = vpack.c.b16 %v775, %v775
        %v784 = vpack.c.b16 %v776, %v776
        %793 = vst [vmem:[%s210] sm:$0xf] %v777
        %794 = vst [vmem:[%s210 + $0x4] sm:$0xf] %v778
        %795 = vst [vmem:[%s210 + $0x8] sm:$0xf] %v779
        %796 = vst [vmem:[%s210 + $0xc] sm:$0xf] %v780
        %797 = vst [vmem:[%s210 + $0x10] sm:$0xf] %v781
        %798 = vst [vmem:[%s210 + $0x14] sm:$0xf] %v782
        %799 = vst [vmem:[%s210 + $0x18] sm:$0xf] %v783
        %800 = vst [vmem:[%s210 + $0x1c] sm:$0xf] %v784
        %s801 = sand.u32 %s126, 1
        %s802 = scalar_lea.sflag [#allocation4], %s801
        %s803 = sand.u32 %s126, 1
        %s804 = smul.addr %s803, 32
        %s805 = scalar_lea.vmem [#allocation3], %s804
        // Predicated region
        $region33: #{tpu_custom_call.1} parent=31 // pred_check
          %p806 = pneg %p136
        $region34: #{tpu_custom_call.1} parent=31 // pred_check_branch
          %808 = sbr.rel (%p806) target = $region36
        $region35: #{tpu_custom_call.1} parent=31 // pred_region
          %s809 = smul.u32 8, %s24
          %s811 = ssub.s32 512, 512
          %812 = vsyncadd %s802, %s811
          %s813 = sadd.s32 %s23, %s809
          %s814 = smul.addr %s22, 8
          %s815 = sadd.s32 %s813, %s814
          %s816 = smul.addr %s815, 64
          %s817 = scalar_lea.hbm %s3, %s816
          %s818 = sshll.u32 %s805, 4
          %s819 = int_to_ptr.vmem [resolvable:$true] %s818
          %824 = dma.vmem_to_hbm [thread:$0]  %s819, 512, %s817, %s802, 64, 64, 4
        $region36: #{tpu_custom_call.1} parent=31 // pred_fallthru
          _
      $region32: #{tpu_custom_call.1} parent=5 // pred_fallthru
        _
      %p825 = scmp.le.s32.totalorder 2, %s12
      // Predicated region
      $region37: #{tpu_custom_call.1} parent=5 // pred_check
        %p826 = pneg %p825
      $region38: #{tpu_custom_call.1} parent=5 // pred_check_branch
        %828 = sbr.rel (%p826) target = $region40
      $region39: #{tpu_custom_call.1} parent=5 // pred_region
        %s829 = ssub.s32 %s12, 2
        // Predicated region
        $region41: #{tpu_custom_call.1} parent=39 // pred_check
          %p830 = pneg %p142
        $region42: #{tpu_custom_call.1} parent=39 // pred_check_branch
          %832 = sbr.rel (%p830) target = $region44
        $region43: #{tpu_custom_call.1} parent=39 // pred_region
          %s833 = sand.u32 %s127, 1
          %s834 = scalar_lea.sflag [#allocation4], %s833
          %s835 = sand.u32 %s127, 1
          %s836 = smul.addr %s835, 32
          %s837 = scalar_lea.vmem [#allocation3], %s836
          %838 = dma.done %s834, 512
        $region44: #{tpu_custom_call.1} parent=39 // pred_fallthru
          _
      $region40: #{tpu_custom_call.1} parent=5 // pred_fallthru
        _
    $region6: #{tpu_custom_call.1} parent=1 // loop_footer
      %s16 = sadd.s32 1, %s12
    $region7: #{tpu_custom_call.1} parent=1 // loop_footer_branch
      %11 = sbr.rel target = $region3
    $region8: #{tpu_custom_call.1} parent=1 // loop_exit
      _
    %839 = vsyncpa [#allocation4], 1
    %s840 = scalar_lea.sflag [#allocation4], 1
    %841 = vsyncpa %s840, 1

</llo_original>
